<compile_context>
chip_gen: v7x
topology: tpu7x:2x2x1
jax: 0.10.0
libtpu: 0.0.40
codegen_flags: <defaults>
</compile_context>

<pallas_src>
import functools

import jax
import jax.numpy as jnp
from jax.experimental import pallas as pl
from jax.experimental.pallas import tpu as pltpu

_LANE = 128


def _dc_bce_partial_kernel(x_ref, y_ref, out_ref, *, total_l, tile_l, needs_mask):
    """Per-tile partial sums: [intersect, sum_pred, sum_gt, bce_sum] per (b,c) row."""
    x = x_ref[...].astype(jnp.float32)   # (R, TL) logits (native dtype in HBM)
    y = y_ref[...].astype(jnp.float32)   # (R, TL) one-hot / region targets

    if needs_mask:
        # Ragged last tile: mask targets before they enter any sum; x itself is
        # not pre-masked because p / bce are post-masked below (jnp.where with a
        # false predicate discards padding garbage, including NaN/inf).
        k = pl.program_id(0)
        lane = jax.lax.broadcasted_iota(jnp.int32, x.shape, 1)
        valid = (lane + k * tile_l) < total_l
        y = jnp.where(valid, y, 0.0)

    # 2 EUP transcendentals per element (tanh + log) instead of 3 (exp, log1p, recip):
    #   sigmoid(x) = 0.5*tanh(0.5*x) + 0.5
    #   log1p(exp(-|x|)) = -log(sigmoid(|x|)) = -log(max(p, 1-p))
    p = 0.5 * jnp.tanh(0.5 * x) + 0.5
    bce = jnp.maximum(x, 0.0) - x * y - jnp.log(jnp.maximum(p, 1.0 - p))

    if needs_mask:
        p = jnp.where(valid, p, 0.0)
        bce = jnp.where(valid, bce, 0.0)

    # Lane reductions over the whole tile, amortized over the full tile width.
    intersect = jnp.sum(p * y, axis=-1, keepdims=True)   # (R, 1)
    sum_pred  = jnp.sum(p,     axis=-1, keepdims=True)   # (R, 1)
    sum_gt    = jnp.sum(y,     axis=-1, keepdims=True)   # (R, 1)
    bce_sum   = jnp.sum(bce,   axis=-1, keepdims=True)   # (R, 1)

    # One store per grid step (no cross-step accumulator -> grid axis stays parallel).
    out_ref[0, :, :] = jnp.concatenate([intersect, sum_pred, sum_gt, bce_sum], axis=-1)


def dc_and_bce_loss(net_output, target, *, weight_ce=1.0, weight_dice=1.0,
                    smooth=1e-5, pair_budget_bytes=12 * 1024 * 1024):
    """use_ignore_label=False path of DC_and_BCE_loss (batch_dice=True, do_bg=True)."""
    # TODO(synk): use_ignore_label=True masked path (mask = 1 - target[:, -1:]) not implemented.
    B, C, H, W = net_output.shape
    R = B * C
    L = H * W

    # Free, contiguous views of the NCHW inputs -- no transpose, no dtype cast.
    x = net_output.reshape(R, L)
    y = target.reshape(R, L)

    # Tile size from VMEM budget: ~pair_budget_bytes per single-buffered (x + y)
    # block pair (x2 for double buffering), so per-step overhead is amortized and
    # strided DMA row segments stay large.
    bytes_per_lane = R * (x.dtype.itemsize + y.dtype.itemsize)
    budget_tile = max(_LANE, (pair_budget_bytes // max(bytes_per_lane, 1)) // _LANE * _LANE)
    # Force >= 2 grid steps for anything bigger than one lane-group so the
    # parallel grid axis can be split across both v7x TensorCores.
    half_l = -(-L // 2)
    two_tile = max(_LANE, -(-half_l // _LANE) * _LANE)
    tile_l = min(budget_tile, two_tile)

    num_tiles = pl.cdiv(L, tile_l)
    needs_mask = (L % tile_l) != 0         # ragged tail block handled in-kernel

    kernel = functools.partial(
        _dc_bce_partial_kernel,
        total_l=L, tile_l=tile_l, needs_mask=needs_mask)

    elems = R * L
    cost = pl.CostEstimate(
        flops=12 * elems,
        transcendentals=2 * elems,
        bytes_accessed=elems * (x.dtype.itemsize + y.dtype.itemsize)
        + num_tiles * R * 4 * 4)

    partials = pl.pallas_call(
        kernel,
        out_shape=jax.ShapeDtypeStruct((num_tiles, R, 4), jnp.float32),
        grid_spec=pltpu.PrefetchScalarGridSpec(
            num_scalar_prefetch=0,
            grid=(num_tiles,),
            in_specs=[pl.BlockSpec((R, tile_l), lambda k: (0, k)),
                      pl.BlockSpec((R, tile_l), lambda k: (0, k))],
            out_specs=pl.BlockSpec((1, R, 4), lambda k: (k, 0, 0)),
        ),
        compiler_params=pltpu.CompilerParams(
            dimension_semantics=("parallel",),
            vmem_limit_bytes=48 * 1024 * 1024),
        cost_estimate=cost,
    )(x, y)

    # Tiny epilogue on (num_tiles, B*C, 4) partial sums -- negligible work in XLA.
    sums = jnp.sum(partials, axis=0).reshape(B, C, 4)
    per_c = jnp.sum(sums, axis=0)                      # (C, 4): batch_dice=True reduce
    intersect = per_c[:, 0]
    sum_pred = per_c[:, 1]
    sum_gt = per_c[:, 2]
    bce_total = per_c[:, 3]

    dc = (2.0 * intersect + smooth) / jnp.maximum(sum_gt + sum_pred + smooth, 1e-8)
    dc_loss = -jnp.mean(dc)                            # do_bg=True: mean over all channels
    ce_loss = jnp.sum(bce_total) / float(B * C * H * W)
    return weight_ce * ce_loss + weight_dice * dc_loss


def _reference_loss(net_output, target, weight_ce=1.0, weight_dice=1.0, smooth=1e-5):
    x = net_output.astype(jnp.float32)
    y = target.astype(jnp.float32)
    ce = jnp.mean(jnp.maximum(x, 0.0) - x * y + jnp.log1p(jnp.exp(-jnp.abs(x))))
    p = jax.nn.sigmoid(x)
    axes = (0, 2, 3)  # batch_dice=True: reduce batch + spatial
    intersect = jnp.sum(p * y, axis=axes)
    sum_pred = jnp.sum(p, axis=axes)
    sum_gt = jnp.sum(y, axis=axes)
    dc = (2.0 * intersect + smooth) / jnp.maximum(sum_gt + sum_pred + smooth, 1e-8)
    return weight_ce * ce - weight_dice * jnp.mean(dc)


if __name__ == "__main__":
    key = jax.random.PRNGKey(0)
    k1, k2, k3, k4, k5, k6 = jax.random.split(key, 6)
    TOL = 1e-3  # tanh/log-based sigmoid+softplus rewrite -> ~1e-4-level deviation

    # Test 1: typical small NCHW region-based segmentation batch.
    # L=256 -> two full 128-lane tiles, no tail mask.
    B, C, H, W = 2, 4, 16, 16
    net_output = jax.random.normal(k1, (B, C, H, W), dtype=jnp.float32)       # raw logits
    target = jax.random.bernoulli(k2, 0.5, (B, C, H, W)).astype(jnp.float32)  # one-hot targets
    loss = jax.block_until_ready(dc_and_bce_loss(net_output, target))
    ref = jax.block_until_ready(_reference_loss(net_output, target))
    assert jnp.isfinite(loss), "kernel produced non-finite loss"
    assert abs(float(loss) - float(ref)) < TOL, (float(loss), float(ref))

    # Test 2: odd spatial size, L=130 -> two tiles with a ragged (masked) tail block.
    B2, C2, H2, W2 = 2, 3, 10, 13
    x2 = jax.random.normal(k3, (B2, C2, H2, W2), dtype=jnp.float32)
    y2 = jax.random.bernoulli(k4, 0.3, (B2, C2, H2, W2)).astype(jnp.float32)
    loss2 = jax.block_until_ready(dc_and_bce_loss(x2, y2))
    ref2 = jax.block_until_ready(_reference_loss(x2, y2))
    assert jnp.isfinite(loss2), "kernel produced non-finite loss (masked tail)"
    assert abs(float(loss2) - float(ref2)) < TOL, (float(loss2), float(ref2))

    # Test 3: tiny odd L (< 128) -> single partial block, in-kernel mask path.
    B3, C3, H3, W3 = 1, 2, 7, 9
    x3 = jax.random.normal(k5, (B3, C3, H3, W3), dtype=jnp.float32)
    y3 = jax.random.bernoulli(k6, 0.4, (B3, C3, H3, W3)).astype(jnp.float32)
    loss3 = jax.block_until_ready(dc_and_bce_loss(x3, y3))
    ref3 = jax.block_until_ready(_reference_loss(x3, y3))
    assert jnp.isfinite(loss3), "kernel produced non-finite loss (single masked block)"
    assert abs(float(loss3) - float(ref3)) < TOL, (float(loss3), float(ref3))

    print("KERNEL_OK")
</pallas_src>

<mosaic_0001>
module attributes {stable_mosaic.version = 11 : i64} {
  func.func @_dc_bce_partial_kernel(%arg0: i32, %arg1: memref<8x128xf32, #tpu.memory_space<vmem>>, %arg2: memref<8x128xf32, #tpu.memory_space<vmem>>, %arg3: memref<1x8x4xf32, #tpu.memory_space<vmem>>) attributes {dimension_semantics = [#tpu.dimension_semantics<parallel>], iteration_bounds = array<i64: 2>, scalar_prefetch = 0 : i64, scratch_operands = 0 : i64, tpu.core_type = #tpu.core_type<tc>, window_params = [{transform_indices = @transform_0, window_bounds = array<i64: 8, 128>}, {transform_indices = @transform_1, window_bounds = array<i64: 8, 128>}, {transform_indices = @transform_2, window_bounds = array<i64: 1, 8, 4>}]} {
    %c0 = arith.constant 0 : index
    %c0_0 = arith.constant 0 : index
    %0 = vector.load %arg1[%c0, %c0_0] : memref<8x128xf32, #tpu.memory_space<vmem>>, vector<8x128xf32>
    %c0_1 = arith.constant 0 : index
    %c0_2 = arith.constant 0 : index
    %1 = vector.load %arg2[%c0_1, %c0_2] : memref<8x128xf32, #tpu.memory_space<vmem>>, vector<8x128xf32>
    %cst = arith.constant 5.000000e-01 : f32
    %2 = vector.broadcast %cst : f32 to vector<8x128xf32>
    %3 = arith.mulf %2, %0 : vector<8x128xf32>
    %4 = math.tanh %3 : vector<8x128xf32>
    %cst_3 = arith.constant 5.000000e-01 : f32
    %5 = vector.broadcast %cst_3 : f32 to vector<8x128xf32>
    %6 = arith.mulf %5, %4 : vector<8x128xf32>
    %cst_4 = arith.constant 5.000000e-01 : f32
    %7 = vector.broadcast %cst_4 : f32 to vector<8x128xf32>
    %8 = arith.addf %6, %7 : vector<8x128xf32>
    %cst_5 = arith.constant 0.000000e+00 : f32
    %9 = vector.broadcast %cst_5 : f32 to vector<8x128xf32>
    %10 = arith.maximumf %0, %9 : vector<8x128xf32>
    %11 = arith.mulf %0, %1 : vector<8x128xf32>
    %12 = arith.subf %10, %11 : vector<8x128xf32>
    %cst_6 = arith.constant 1.000000e+00 : f32
    %13 = vector.broadcast %cst_6 : f32 to vector<8x128xf32>
    %14 = arith.subf %13, %8 : vector<8x128xf32>
    %15 = arith.maximumf %8, %14 : vector<8x128xf32>
    %16 = math.log %15 : vector<8x128xf32>
    %17 = arith.subf %12, %16 : vector<8x128xf32>
    %18 = arith.mulf %8, %1 : vector<8x128xf32>
    %cst_7 = arith.constant dense<0.000000e+00> : vector<8xf32>
    %19 = vector.multi_reduction <add>, %18, %cst_7 [1] : vector<8x128xf32> to vector<8xf32>
    %20 = vector.shape_cast %19 : vector<8xf32> to vector<8x1xf32>
    %cst_8 = arith.constant dense<0.000000e+00> : vector<8xf32>
    %21 = vector.multi_reduction <add>, %8, %cst_8 [1] : vector<8x128xf32> to vector<8xf32>
    %22 = vector.shape_cast %21 : vector<8xf32> to vector<8x1xf32>
    %cst_9 = arith.constant dense<0.000000e+00> : vector<8xf32>
    %23 = vector.multi_reduction <add>, %1, %cst_9 [1] : vector<8x128xf32> to vector<8xf32>
    %24 = vector.shape_cast %23 : vector<8xf32> to vector<8x1xf32>
    %cst_10 = arith.constant dense<0.000000e+00> : vector<8xf32>
    %25 = vector.multi_reduction <add>, %17, %cst_10 [1] : vector<8x128xf32> to vector<8xf32>
    %26 = vector.shape_cast %25 : vector<8xf32> to vector<8x1xf32>
    %27 = tpu.concatenate %20, %22, %24, %26 in 1 : vector<8x1xf32>, vector<8x1xf32>, vector<8x1xf32>, vector<8x1xf32> -> vector<8x4xf32>
    %c0_11 = arith.constant 0 : index
    %c0_12 = arith.constant 0 : index
    %c0_13 = arith.constant 0 : index
    %28 = vector.load %arg3[%c0_11, %c0_12, %c0_13] : memref<1x8x4xf32, #tpu.memory_space<vmem>>, vector<1x8x4xf32>
    %29 = vector.shape_cast %28 : vector<1x8x4xf32> to vector<8x4xf32>
    %30 = vector.shape_cast %27 : vector<8x4xf32> to vector<1x8x4xf32>
    tpu.vector_store %arg3[%c0_11, %c0_12, %c0_13], %30 {strides = array<i32>} : memref<1x8x4xf32, #tpu.memory_space<vmem>>, vector<1x8x4xf32>,
    return
  }
  func.func @transform_0(%arg0: i32) -> (i32, i32) {
    %c0_i32 = arith.constant 0 : i32
    %c0_i32_0 = arith.constant 0 : i32
    return %c0_i32, %arg0 : i32, i32
  }
  func.func @transform_1(%arg0: i32) -> (i32, i32) {
    %c0_i32 = arith.constant 0 : i32
    %c0_i32_0 = arith.constant 0 : i32
    return %c0_i32, %arg0 : i32, i32
  }
  func.func @transform_2(%arg0: i32) -> (i32, i32, i32) {
    %c0_i32 = arith.constant 0 : i32
    %c0_i32_0 = arith.constant 0 : i32
    %c0_i32_1 = arith.constant 0 : i32
    return %arg0, %c0_i32, %c0_i32_0 : i32, i32, i32
  }
}

</mosaic_0001>

<llo_original>
// kernel: tpu_custom_call.1
$region0: #{tpu_custom_call.1}
  #allocation0 [shape = 'u32[]', space=smem, size = 0x4, offset = 0x4, fixed_abs, tag = 'smem constant byte address 0x4 - core index']
  #allocation1 [shape = 'u32[144,128]{1,0:T(1,128)}', space=vmem, size = 0x12000, scoped, tag = 'internal scratch']
  %s0 = inlined_call_operand.hbm [shape: f32[8,256], index: 0, kind: input, shape index: {}]
  %s1 = inlined_call_operand.hbm [shape: f32[8,256], index: 1, kind: input, shape index: {}]
  %s2 = inlined_call_operand.vmem [shape: f32[2,8,4], index: 2, kind: output, shape index: {}]
  %s3 = sld [smem:[#allocation0]]
  $region49: #{tpu_custom_call.1} parent=0
    _
  %s5 = ssub.s32 1, %s3
  %s6 = scalar_select 0, %s5, %s3
  $region1: #{tpu_custom_call.1} parent=0
    #allocation2 [shape = 'u8[8192]{0}', space=vmem, size = 0x2000, scoped, tag = 'input window, operand 0']
    #allocation3 [shape = 's32[2]{0}', space=sflag, size = 0x8, scoped, tag = 'scoped memory for tpu_custom_call.1']
    #allocation4 [shape = 'u8[8192]{0}', space=vmem, size = 0x2000, scoped, tag = 'input window, operand 1']
    #allocation5 [shape = 's32[2]{0}', space=sflag, size = 0x8, scoped, tag = 'scoped memory for tpu_custom_call.1']
    %7 = vsyncpa [#allocation3], 0
    %s8 = scalar_lea.sflag [#allocation3], 1
    %9 = vsyncpa %s8, 0
    %10 = vsyncpa [#allocation5], 0
    %s11 = scalar_lea.sflag [#allocation5], 1
    %12 = vsyncpa %s11, 0
    loop: start=0, step=1, limit=4
    $region2: #{tpu_custom_call.1} parent=1 // loop_pre_header
      _
    $region3: #{tpu_custom_call.1} parent=1 // loop_header
      %s14 = sphi 0, %s18
      %p15 = scmp.ge.s32.totalorder %s14, 4
      %s24 = sphi 0, %s26
      %s27 = sphi 0, %s24
      %s28 = sphi 0, %s27
      %s44 = sphi 0, %s28
      %s50 = sphi 0, %s52
      %s53 = sphi 0, %s50
      %s54 = sphi 0, %s53
      %s70 = sphi 0, %s54
      %s76 = sphi 0, %s78
      %s79 = sphi 0, %s76
      %s80 = sphi 0, %s79
      %s96 = sphi 0, %s80
    $region4: #{tpu_custom_call.1} parent=1 // loop_header_branch
      %17 = sbr.rel (%p15) target = $region8
    $region5: #{tpu_custom_call.1} parent=1 // loop_body
      %s19 = ssub.s32 %s14, 1
      %s20 = ssub.s32 %s14, 2
      %s21 = sadd.s32 %s14, 1
      %s22 = ssub.s32 %s14, %s21
      %p23 = scmp.eq.s32.totalorder %s22, 0
      %s25 = sadd.s32 %s24, 1
      %s26 = scalar_select %p23, %s24, %s25
      %p29 = pneg %p23
      %p30 = scmp.eq.s32.totalorder %s14, 1
      %p31 = por %p29, %p30
      %p32 = scmp.ne.s32.totalorder %s24, %s27
      %p33 = scmp.eq.s32.totalorder %s14, 0
      %p34 = por %p32, %p33
      %p35 = scmp.ne.s32.totalorder %s24, %s27
      %p36 = scmp.eq.s32.totalorder %s19, 1
      %p37 = por %p35, %p36
      %p38 = scmp.ne.s32.totalorder %s27, %s28
      %p39 = scmp.eq.s32.totalorder %s19, 0
      %p40 = por %p38, %p39
      %p41 = scmp.ne.s32.totalorder %s27, %s28
      %p42 = scmp.eq.s32.totalorder %s20, 1
      %p43 = por %p41, %p42
      %p45 = scmp.ne.s32.totalorder %s28, %s44
      %p46 = scmp.eq.s32.totalorder %s20, 0
      %p47 = por %p45, %p46
      %s48 = ssub.s32 %s14, %s21
      %p49 = scmp.eq.s32.totalorder %s48, 0
      %s51 = sadd.s32 %s50, 1
      %s52 = scalar_select %p49, %s50, %s51
      %p55 = pneg %p49
      %p56 = scmp.eq.s32.totalorder %s14, 1
      %p57 = por %p55, %p56
      %p58 = scmp.ne.s32.totalorder %s50, %s53
      %p59 = scmp.eq.s32.totalorder %s14, 0
      %p60 = por %p58, %p59
      %p61 = scmp.ne.s32.totalorder %s50, %s53
      %p62 = scmp.eq.s32.totalorder %s19, 1
      %p63 = por %p61, %p62
      %p64 = scmp.ne.s32.totalorder %s53, %s54
      %p65 = scmp.eq.s32.totalorder %s19, 0
      %p66 = por %p64, %p65
      %p67 = scmp.ne.s32.totalorder %s53, %s54
      %p68 = scmp.eq.s32.totalorder %s20, 1
      %p69 = por %p67, %p68
      %p71 = scmp.ne.s32.totalorder %s54, %s70
      %p72 = scmp.eq.s32.totalorder %s20, 0
      %p73 = por %p71, %p72
      %s74 = ssub.s32 %s14, %s21
      %p75 = scmp.eq.s32.totalorder %s74, 0
      %s77 = sadd.s32 %s76, 1
      %s78 = scalar_select %p75, %s76, %s77
      %p81 = pneg %p75
      %p82 = scmp.eq.s32.totalorder %s14, 1
      %p83 = por %p81, %p82
      %p84 = scmp.ne.s32.totalorder %s76, %s79
      %p85 = scmp.eq.s32.totalorder %s14, 0
      %p86 = por %p84, %p85
      %p87 = scmp.ne.s32.totalorder %s76, %s79
      %p88 = scmp.eq.s32.totalorder %s19, 1
      %p89 = por %p87, %p88
      %p90 = scmp.ne.s32.totalorder %s79, %s80
      %p91 = scmp.eq.s32.totalorder %s19, 0
      %p92 = por %p90, %p91
      %p93 = scmp.ne.s32.totalorder %s79, %s80
      %p94 = scmp.eq.s32.totalorder %s20, 1
      %p95 = por %p93, %p94
      %p97 = scmp.ne.s32.totalorder %s80, %s96
      %p98 = scmp.eq.s32.totalorder %s20, 0
      %p99 = por %p97, %p98
      %p100 = scmp.le.s32.totalorder 1, %s14
      %p101 = scmp.lt.s32.totalorder %s14, 3
      %p102 = pnand %p100, %p101
      %p103 = pneg %p102
      // Predicated region
      $region9: #{tpu_custom_call.1} parent=5 // pred_check
        _
      $region10: #{tpu_custom_call.1} parent=5 // pred_check_branch
        %105 = sbr.rel (%p102) target = $region12
      $region11: #{tpu_custom_call.1} parent=5 // pred_region
        %s106 = ssub.s32 %s14, 1
      $region12: #{tpu_custom_call.1} parent=5 // pred_fallthru
        _
      %p107 = scmp.lt.s32.totalorder %s14, 2
      // Predicated region
      $region13: #{tpu_custom_call.1} parent=5 // pred_check
        %p108 = pneg %p107
      $region14: #{tpu_custom_call.1} parent=5 // pred_check_branch
        %110 = sbr.rel (%p108) target = $region16
      $region15: #{tpu_custom_call.1} parent=5 // pred_region
        // Predicated region
        $region17: #{tpu_custom_call.1} parent=15 // pred_check
          %p111 = pneg %p34
        $region18: #{tpu_custom_call.1} parent=15 // pred_check_branch
          %113 = sbr.rel (%p111) target = $region20
        $region19: #{tpu_custom_call.1} parent=15 // pred_region
          %s114 = sand.u32 %s24, 1
          %s115 = scalar_lea.sflag [#allocation3], %s114
          %s116 = sand.u32 %s24, 1
          %s117 = smul.addr %s116, 8
          %s118 = scalar_lea.vmem [#allocation2], %s117
          %s120 = ssub.s32 128, 128
          %121 = vsyncadd %s115, %s120
          %s122 = smul.addr %s14, 128
          %s123 = scalar_lea.hbm %s0, %s122
          %s125 = sshll.u32 %s118, 4
          %s126 = int_to_ptr.vmem [resolvable:$true] %s125
          %128 = dma.hbm_to_vmem [thread:$0]  %s123, 128, %s126, %s115
        $region20: #{tpu_custom_call.1} parent=15 // pred_fallthru
          _
        // Predicated region
        $region21: #{tpu_custom_call.1} parent=15 // pred_check
          %p129 = pneg %p60
        $region22: #{tpu_custom_call.1} parent=15 // pred_check_branch
          %131 = sbr.rel (%p129) target = $region24
        $region23: #{tpu_custom_call.1} parent=15 // pred_region
          %s132 = sand.u32 %s50, 1
          %s133 = scalar_lea.sflag [#allocation5], %s132
          %s134 = sand.u32 %s50, 1
          %s135 = smul.addr %s134, 8
          %s136 = scalar_lea.vmem [#allocation4], %s135
          %s138 = ssub.s32 128, 128
          %139 = vsyncadd %s133, %s138
          %s140 = smul.addr %s14, 128
          %s141 = scalar_lea.hbm %s1, %s140
          %s143 = sshll.u32 %s136, 4
          %s144 = int_to_ptr.vmem [resolvable:$true] %s143
          %146 = dma.hbm_to_vmem [thread:$0]  %s141, 128, %s144, %s133
        $region24: #{tpu_custom_call.1} parent=15 // pred_fallthru
          _
      $region16: #{tpu_custom_call.1} parent=5 // pred_fallthru
        _
      %p147 = scmp.le.s32.totalorder 1, %s14
      %p148 = scmp.lt.s32.totalorder %s14, 3
      %p149 = pnand %p147, %p148
      %p150 = pneg %p149
      // Predicated region
      $region25: #{tpu_custom_call.1} parent=5 // pred_check
        _
      $region26: #{tpu_custom_call.1} parent=5 // pred_check_branch
        %152 = sbr.rel (%p149) target = $region28
      $region27: #{tpu_custom_call.1} parent=5 // pred_region
        %s153 = ssub.s32 %s14, 1
        %s154 = sand.u32 %s27, 1
        %s155 = scalar_lea.sflag [#allocation3], %s154
        %s156 = sand.u32 %s27, 1
        %s157 = smul.addr %s156, 8
        %s158 = scalar_lea.vmem [#allocation2], %s157
        // Predicated region
        $region29: #{tpu_custom_call.1} parent=27 // pred_check
          %p159 = pneg %p40
        $region30: #{tpu_custom_call.1} parent=27 // pred_check_branch
          %161 = sbr.rel (%p159) target = $region32
        $region31: #{tpu_custom_call.1} parent=27 // pred_region
          %162 = dma.done %s155, 128
        $region32: #{tpu_custom_call.1} parent=27 // pred_fallthru
          _
        %s163 = sand.u32 %s53, 1
        %s164 = scalar_lea.sflag [#allocation5], %s163
        %s165 = sand.u32 %s53, 1
        %s166 = smul.addr %s165, 8
        %s167 = scalar_lea.vmem [#allocation4], %s166
        // Predicated region
        $region33: #{tpu_custom_call.1} parent=27 // pred_check
          %p168 = pneg %p66
        $region34: #{tpu_custom_call.1} parent=27 // pred_check_branch
          %170 = sbr.rel (%p168) target = $region36
        $region35: #{tpu_custom_call.1} parent=27 // pred_region
          %171 = dma.done %s164, 128
        $region36: #{tpu_custom_call.1} parent=27 // pred_fallthru
          _
        %s172 = sand.u32 %s27, 1
        %s173 = scalar_lea.sflag [#allocation3], %s172
        %s174 = sand.u32 %s27, 1
        %s175 = smul.addr %s174, 8
        %s176 = scalar_lea.vmem [#allocation2], %s175
        %p177 = pneg %p40
        %p178 = pneg %p37
        %s179 = sand.u32 %s53, 1
        %s180 = scalar_lea.sflag [#allocation5], %s179
        %s181 = sand.u32 %s53, 1
        %s182 = smul.addr %s181, 8
        %s183 = scalar_lea.vmem [#allocation4], %s182
        %p184 = pneg %p66
        %p185 = pneg %p63
        %p186 = pneg %p92
        %p187 = pneg %p89
        %p188 = scmp.lt.s32.totalorder %s19, 1
        %s189 = scalar_select %p188, %s19, 1
        %s190 = smul.addr %s189, 8
        %s191 = scalar_lea.vmem %s2, %s190
        %p192 = scmp.lt.s32.totalorder %s19, 1
        %s193 = scalar_select %p192, %s19, 1
        %s194 = smul.addr %s193, 8
        %s195 = scalar_lea.vmem %s2, %s194
        %v196 = vld [vmem:[%s158] sm:$0xff]
        %v197 = vld [vmem:[%s167] sm:$0xff]
        %v198 = vmul.f32 %v196, 0.5
        %v199 = vtanh.pop %v198
        %v200 = vmul.f32 %v199, 0.5
        %v201 = vadd.f32 %v200, 0.5
        %v202 = vmax.f32 %v196, 0.0
        %v203 = vmul.f32 %v196, %v197
        %v204 = vsub.f32 %v202, %v203
        %v205 = vsub.f32 1.0, %v201
        %v206 = vmax.f32 %v201, %v205
        %v207 = vlog2.pop %v206
        %v208 = vmul.f32 %v207, 0.6931472
        %v209 = vsub.f32 %v204, %v208
        %v210 = vmul.f32 %v201, %v197
        %211 = vadd.xlane.f32.xlu0 %v210
        %v212 = vpop.xlane.xlu0 %211
        %213 = vadd.xlane.f32.xlu0 %v201
        %v214 = vpop.xlane.xlu0 %213
        %215 = vadd.xlane.f32.xlu0 %v197
        %v216 = vpop.xlane.xlu0 %215
        %217 = vadd.xlane.f32.xlu0 %v209
        %v218 = vpop.xlane.xlu0 %217
        %vm219 = vcmask 7168
        %v220 = vsel %vm219, %v212, %v214
        %vm221 = vcmask 15360
        %v222 = vsel %vm221, %v220, %v216
        %vm223 = vcmask 23552
        %v224 = vsel %vm223, %v222, %v218
        %vm225 = vcmask 31744
        %226 = vst.msk [vmem:[%s195] sm:$0xff] %vm225, %v224
        %p227 = scmp.lt.s32.totalorder %s19, 1
        %s228 = scalar_select %p227, %s19, 1
        %s229 = smul.addr %s228, 8
        %s230 = scalar_lea.vmem %s2, %s229
        // Predicated region
        $region37: #{tpu_custom_call.1} parent=27 // pred_check
          %p231 = pneg %p89
        $region38: #{tpu_custom_call.1} parent=27 // pred_check_branch
          %233 = sbr.rel (%p231) target = $region40
        $region39: #{tpu_custom_call.1} parent=27 // pred_region
          _
        $region40: #{tpu_custom_call.1} parent=27 // pred_fallthru
          _
      $region28: #{tpu_custom_call.1} parent=5 // pred_fallthru
        _
      %p234 = scmp.le.s32.totalorder 2, %s14
      // Predicated region
      $region41: #{tpu_custom_call.1} parent=5 // pred_check
        %p235 = pneg %p234
      $region42: #{tpu_custom_call.1} parent=5 // pred_check_branch
        %237 = sbr.rel (%p235) target = $region44
      $region43: #{tpu_custom_call.1} parent=5 // pred_region
        %s238 = ssub.s32 %s14, 2
        // Predicated region
        $region45: #{tpu_custom_call.1} parent=43 // pred_check
          %p239 = pneg %p95
        $region46: #{tpu_custom_call.1} parent=43 // pred_check_branch
          %241 = sbr.rel (%p239) target = $region48
        $region47: #{tpu_custom_call.1} parent=43 // pred_region
          %p242 = scmp.lt.s32.totalorder %s20, 1
          %s243 = scalar_select %p242, %s20, 1
          %s244 = smul.addr %s243, 8
          %s245 = scalar_lea.vmem %s2, %s244
        $region48: #{tpu_custom_call.1} parent=43 // pred_fallthru
          _
      $region44: #{tpu_custom_call.1} parent=5 // pred_fallthru
        _
    $region6: #{tpu_custom_call.1} parent=1 // loop_footer
      %s18 = sadd.s32 1, %s14
    $region7: #{tpu_custom_call.1} parent=1 // loop_footer_branch
      %13 = sbr.rel target = $region3
    $region8: #{tpu_custom_call.1} parent=1 // loop_exit
      _
    %246 = vsyncpa [#allocation3], 1
    %s247 = scalar_lea.sflag [#allocation3], 1
    %248 = vsyncpa %s247, 1
    %249 = vsyncpa [#allocation5], 1
    %s250 = scalar_lea.sflag [#allocation5], 1
    %251 = vsyncpa %s250, 1

</llo_original>
